<compile_context>
chip_gen: v7x
topology: tpu7x:2x2x1
jax: 0.10.0
libtpu: 0.0.40
codegen_flags: <defaults>
</compile_context>

<pallas_src>
import jax
import jax.numpy as jnp
from jax.experimental import pallas as pl
from jax.experimental.pallas import tpu as pltpu

_TINY_ELEMS = 16 * 1024  # below this, a fused XLA slice+cast beats pallas_call overhead
_MIN_GRID_STEPS = 4      # >=4 pipelined steps: hide VMEM pass, enable v7x 2-TC split


def _copy_cast_kernel(x_ref, o_ref):
    # x_ref: (rows_tile, lane) tile of the batch-0 slice (batch dim squeezed
    #        away by the BlockSpec); o_ref: matching float32 output tile.
    o_ref[...] = x_ref[...].astype(o_ref.dtype)


def _round_up(x, m):
    return (x + m - 1) // m * m


def _default_tile_budget():
    """Per-step double-buffered (in+out) VMEM byte budget, per chip generation."""
    vmem_phys = 128 * 1024 * 1024
    try:
        info = pltpu.get_tpu_info()
        vmem_phys = int(getattr(info, "vmem_capacity_bytes", vmem_phys))
    except Exception:
        pass  # no TPU info available (e.g. interpret mode) -> conservative default
    if vmem_phys >= 128 * 1024 * 1024:
        # v5e / v6e: 128 MiB physical.  ~4 MiB per side per buffer is past the
        # measured mem-bound bandwidth knee; vmem_limit_bytes is raised to match.
        return 16 * 1024 * 1024
    # v7x: 64 MiB physical / 32 MiB default scoped -> stay well inside it.
    return 8 * 1024 * 1024


def _pick_lane_width(n, row_align, min_steps=_MIN_GRID_STEPS):
    """Lane width (multiple of 128) dividing n; keep rows sublane-dense & splittable."""
    cands = [l for l in (2048, 1024, 512, 256, 128) if n % l == 0]
    if not cands:
        return None

    def score(lane):
        rows = n // lane
        return (
            rows % row_align == 0 and rows >= min_steps * row_align,  # dense + >=4 steps
            rows % row_align == 0,                                    # dense sublanes
            rows >= row_align,                                        # at least one full group
            lane,                                                     # then widest
        )

    return max(cands, key=score)


def _pick_row_tile(rows, row_bytes, budget_bytes, align, min_steps=_MIN_GRID_STEPS):
    """Row tile: multiple of `align`, double-buffered footprint within budget,
    >= min_steps grid steps when possible, preferring a divisor of `rows`."""
    if rows <= align:
        return int(rows)  # full extent is always a legal block dim
    # Cap by VMEM budget (row_bytes already includes double-buffering).
    cap = max(align, (budget_bytes // max(row_bytes, 1)) // align * align)
    # Cap so the grid has >= min_steps pipelined steps.
    steps_cap = max(align, _round_up(pl.cdiv(rows, min_steps), align))
    cap = min(cap, steps_cap, rows)
    cap = max(align, cap // align * align)
    # Prefer the largest aligned tile <= cap that divides rows (no ragged edge).
    t = cap
    while t >= align:
        if rows % t == 0:
            return int(t)
        t -= align
    return int(cap)  # ragged last block: clipped stores, still correct


def get_block_s(x, layer_id=0, idx=0, *, force_pallas=False, max_tile_bytes=None):
    """Pallas equivalent of GetBlock_s().forward(x, layer_id, idx).

    x: (B, C, D, 1, 1)  ->  (C, D) float32 = x[0, :, :, 0, 0]
    layer_id / idx kept for signature parity (unused by the compute).
    """
    del layer_id, idx
    B, C, D, H, W = x.shape
    assert H == 1 and W == 1, "reference requires singleton trailing dims"

    out_dtype = jnp.float32
    n = C * D
    needs_cast = x.dtype != out_dtype

    # Glue: drop the singleton spatial dims (pure reshape, no compute).
    x3 = x.reshape(B, C, D)

    # XLA fast paths (fusible with consumers, no VMEM round trip):
    #   * no cast needed -> a standalone pallas_call is a pointless vld/vst pass
    #   * tiny tensors   -> custom-call + grid overhead dwarfs the copy
    if not force_pallas and ((not needs_cast) or n < _TINY_ELEMS):
        return x3[0].astype(out_dtype)

    if max_tile_bytes is None:
        max_tile_bytes = _default_tile_budget()

    in_bytes = jnp.dtype(x.dtype).itemsize
    out_bytes = jnp.dtype(out_dtype).itemsize
    # Second-to-last block dim alignment: >=8 sublanes, and a full packed-sublane
    # group for sub-32-bit input dtypes (bf16 -> 16, int8 -> 32).
    row_align = max(8, 32 // in_bytes)

    cost = pl.CostEstimate(flops=0, transcendentals=0,
                           bytes_accessed=n * (in_bytes + out_bytes))
    # Explicit scoped-VMEM limit so the raised tile budget never trips the
    # 16 MiB v5e default; 32 MiB also fits v7x's 64 MiB physical VMEM.
    vmem_limit = int(min(64 * 1024 * 1024,
                         max(32 * 1024 * 1024, 2 * int(max_tile_bytes))))
    cparams = pltpu.CompilerParams(dimension_semantics=("parallel",),
                                   vmem_limit_bytes=vmem_limit)

    lane = _pick_lane_width(n, row_align)
    if lane is not None:
        # Lane-dense path: batch-0 slice is contiguous, view as (rows, lane)
        # with lane % 128 == 0 -> unmasked vector stores.
        rows = n // lane
        # x2: BlockSpec double-buffers both the input and the output tile.
        row_bytes = 2 * lane * (in_bytes + out_bytes)
        tr = _pick_row_tile(rows, row_bytes, max_tile_bytes, align=row_align)
        grid = (pl.cdiv(rows, tr),)
        out2d = pl.pallas_call(
            _copy_cast_kernel,
            out_shape=jax.ShapeDtypeStruct((rows, lane), out_dtype),
            grid=grid,
            in_specs=[
                # Batch-0 selection + row tiling; batch dim squeezed (None).
                pl.BlockSpec((None, tr, lane), lambda i: (0, i, 0)),
            ],
            out_specs=pl.BlockSpec((tr, lane), lambda i: (i, 0)),
            compiler_params=cparams,
            cost_estimate=cost,
        )(x3.reshape(B, rows, lane))
        return out2d.reshape(C, D)

    # Fallback (C*D not a multiple of 128): tile over C, keep full D as the
    # minor (lane) dim.  Budget by the *padded* VMEM footprint (D rounded up to
    # 128 lanes, x2 for double buffering) so small-D shapes cannot blow the
    # scoped-VMEM limit on v5e/v7x.
    # TODO(synk): a lane-dense prefix + XLA tail would avoid masked stores here;
    # this branch only fires for odd shapes, which are typically small.
    padded_row_bytes = _round_up(D, 128) * (in_bytes + out_bytes)
    row_bytes = 2 * padded_row_bytes
    tc = _pick_row_tile(C, row_bytes, max_tile_bytes, align=row_align)
    grid = (pl.cdiv(C, tc),)
    return pl.pallas_call(
        _copy_cast_kernel,
        out_shape=jax.ShapeDtypeStruct((C, D), out_dtype),
        grid=grid,
        in_specs=[pl.BlockSpec((None, tc, D), lambda i: (0, i, 0))],
        out_specs=pl.BlockSpec((tc, D), lambda i: (i, 0)),
        compiler_params=cparams,
        cost_estimate=cost,
    )(x3)


if __name__ == "__main__":
    key = jax.random.PRNGKey(0)
    k1, k2, k3, k4, k5 = jax.random.split(key, 5)

    # (1) Small shape consistent with the module: B=2, C=4, D=16, H=W=1.
    #     Default dispatch takes the fused-XLA path (f32, no cast).
    x_small = jax.random.normal(k1, (2, 4, 16, 1, 1), dtype=jnp.float32)
    ref_small = x_small[0, :, :, 0, 0].astype(jnp.float32)
    out = jax.block_until_ready(get_block_s(x_small, layer_id=0, idx=0))
    assert out.shape == (4, 16) and out.dtype == jnp.float32
    assert bool(jnp.allclose(out, ref_small)), "tiny-path mismatch"

    # (2) Same tiny shape, forced through the Pallas fallback ((C, D) block).
    out_p = jax.block_until_ready(get_block_s(x_small, force_pallas=True))
    assert bool(jnp.allclose(out_p, ref_small)), "pallas fallback mismatch"

    # (3) Larger f32 input with a small tile budget -> lane-dense, multi-step
    #     pipelined path (rows=32, lane=1024, row tile=8, grid=(4,)).
    x_big = jax.random.normal(k2, (2, 64, 512, 1, 1), dtype=jnp.float32)
    ref_big = x_big[0, :, :, 0, 0].astype(jnp.float32)
    out_big = jax.block_until_ready(
        get_block_s(x_big, force_pallas=True, max_tile_bytes=64 * 1024))
    assert out_big.shape == (64, 512) and out_big.dtype == jnp.float32
    assert bool(jnp.allclose(out_big, ref_big)), "lane-dense tiled mismatch"

    # (4) bf16 input -> f32 output, cast inside the kernel (lane-dense path).
    x_bf16 = jax.random.normal(k3, (2, 16, 256, 1, 1), dtype=jnp.bfloat16)
    ref_bf = x_bf16[0, :, :, 0, 0].astype(jnp.float32)
    out_bf = jax.block_until_ready(get_block_s(x_bf16, force_pallas=True))
    assert out_bf.dtype == jnp.float32
    assert bool(jnp.allclose(out_bf, ref_bf)), "bf16 cast mismatch"

    # (5) Ragged edge: C=20 -> fallback path with tc=8, grid=(3,), last block
    #     clipped; verifies no OOB-read garbage lands in valid output rows.
    x_rag = jax.random.normal(k4, (2, 20, 16, 1, 1), dtype=jnp.float32)
    ref_rag = x_rag[0, :, :, 0, 0].astype(jnp.float32)
    out_rag = jax.block_until_ready(get_block_s(x_rag, force_pallas=True))
    assert out_rag.shape == (20, 16)
    assert bool(jnp.allclose(out_rag, ref_rag)), "ragged-block mismatch"

    # (6) Large bf16 via default dispatch (needs cast, n >= tiny threshold):
    #     exercises the per-chip tile-budget derivation + lane-dense kernel.
    x_def = jax.random.normal(k5, (2, 64, 512, 1, 1), dtype=jnp.bfloat16)
    ref_def = x_def[0, :, :, 0, 0].astype(jnp.float32)
    out_def = jax.block_until_ready(get_block_s(x_def))
    assert out_def.dtype == jnp.float32 and out_def.shape == (64, 512)
    assert bool(jnp.allclose(out_def, ref_def)), "default-dispatch bf16 mismatch"

    print("KERNEL_OK")
</pallas_src>

<mosaic_0001>
module attributes {stable_mosaic.version = 11 : i64} {
  func.func @_copy_cast_kernel(%arg0: i32, %arg1: memref<1x4x16xf32, #tpu.memory_space<vmem>>, %arg2: memref<4x16xf32, #tpu.memory_space<vmem>>) attributes {dimension_semantics = [#tpu.dimension_semantics<parallel>], iteration_bounds = array<i64: 1>, scalar_prefetch = 0 : i64, scratch_operands = 0 : i64, tpu.core_type = #tpu.core_type<tc>, window_params = [{transform_indices = @transform_0, window_bounds = array<i64: 1, 4, 16>}, {transform_indices = @transform_1, window_bounds = array<i64: 4, 16>}]} {
    %c0 = arith.constant 0 : index
    %c0_0 = arith.constant 0 : index
    %c0_1 = arith.constant 0 : index
    %0 = vector.load %arg1[%c0, %c0_0, %c0_1] : memref<1x4x16xf32, #tpu.memory_space<vmem>>, vector<1x4x16xf32>
    %1 = vector.shape_cast %0 : vector<1x4x16xf32> to vector<4x16xf32>
    %c0_2 = arith.constant 0 : index
    %c0_3 = arith.constant 0 : index
    %2 = vector.load %arg2[%c0_2, %c0_3] : memref<4x16xf32, #tpu.memory_space<vmem>>, vector<4x16xf32>
    tpu.vector_store %arg2[%c0_2, %c0_3], %1 {strides = array<i32>} : memref<4x16xf32, #tpu.memory_space<vmem>>, vector<4x16xf32>,
    return
  }
  func.func @transform_0(%arg0: i32) -> (i32, i32, i32) {
    %c0_i32 = arith.constant 0 : i32
    %c0_i32_0 = arith.constant 0 : i32
    %c0_i32_1 = arith.constant 0 : i32
    return %c0_i32, %arg0, %c0_i32_0 : i32, i32, i32
  }
  func.func @transform_1(%arg0: i32) -> (i32, i32) {
    %c0_i32 = arith.constant 0 : i32
    %c0_i32_0 = arith.constant 0 : i32
    return %arg0, %c0_i32 : i32, i32
  }
}

</mosaic_0001>

<llo_original>
// kernel: tpu_custom_call.1
$region0: #{tpu_custom_call.1}
  #allocation0 [shape = 'u32[]', space=smem, size = 0x4, offset = 0x4, fixed_abs, tag = 'smem constant byte address 0x4 - core index']
  #allocation1 [shape = 'u32[144,128]{1,0:T(1,128)}', space=vmem, size = 0x12000, scoped, tag = 'internal scratch']
  %s0 = inlined_call_operand.hbm [shape: f32[2,4,16], index: 0, kind: input, shape index: {}]
  %s1 = inlined_call_operand.hbm [shape: f32[4,16], index: 1, kind: output, shape index: {}]
  %s2 = sld [smem:[#allocation0]]
  $region18: #{tpu_custom_call.1} parent=0
    _
  %s4 = ssub.s32 1, %s2
  %s5 = scalar_select 0, %s4, %s2
  $region1: #{tpu_custom_call.1} parent=0
    #allocation2 [shape = 'u8[2048]{0}', space=vmem, size = 0x800, scoped, tag = 'input window, operand 0, single buffered']
    #allocation3 [shape = 's32[1]{0}', space=sflag, size = 0x4, scoped, tag = 'scoped memory for tpu_custom_call.1']
    #allocation4 [shape = 's32[1]{0}', space=sflag, size = 0x4, scoped, tag = 'scoped memory for tpu_custom_call.1']
    #allocation5 [shape = 'u8[2048]{0}', space=vmem, size = 0x800, scoped, tag = 'output window, operand 0, single buffered']
    %6 = vsyncpa [#allocation3], 0
    %7 = vsyncpa [#allocation4], 0
    // Predicated region
    $region2: #{tpu_custom_call.1} parent=1 // pred_check
      _
    $region3: #{tpu_custom_call.1} parent=1 // pred_check_branch
      %9 = sbr.rel (0) target = $region5
    $region4: #{tpu_custom_call.1} parent=1 // pred_region
      %s11 = ssub.s32 64, 64
      %12 = vsyncadd [#allocation3], %s11
      %s14 = sshll.u32 [#allocation2], 4
      %s15 = int_to_ptr.vmem [resolvable:$true] %s14
      %17 = dma.hbm_to_vmem [thread:$0]  %s0, 64, %s15, [#allocation3]
    $region5: #{tpu_custom_call.1} parent=1 // pred_fallthru
      _
    // Predicated region
    $region6: #{tpu_custom_call.1} parent=1 // pred_check
      _
    $region7: #{tpu_custom_call.1} parent=1 // pred_check_branch
      %19 = sbr.rel (0) target = $region9
    $region8: #{tpu_custom_call.1} parent=1 // pred_region
      %20 = dma.done [#allocation3], 64
    $region9: #{tpu_custom_call.1} parent=1 // pred_fallthru
      _
    %v21 = vld [vmem:[#allocation2] sm:$0xf]
    %vm22 = vcmask 125952
    %23 = vst.msk [vmem:[#allocation5] sm:$0xf] %vm22, %v21
    // Predicated region
    $region10: #{tpu_custom_call.1} parent=1 // pred_check
      _
    $region11: #{tpu_custom_call.1} parent=1 // pred_check_branch
      %25 = sbr.rel (0) target = $region13
    $region12: #{tpu_custom_call.1} parent=1 // pred_region
      %s27 = ssub.s32 64, 64
      %28 = vsyncadd [#allocation4], %s27
      %s30 = sshll.u32 [#allocation5], 4
      %s31 = int_to_ptr.vmem [resolvable:$true] %s30
      %33 = dma.vmem_to_hbm [thread:$0]  %s31, 64, %s1, [#allocation4]
    $region13: #{tpu_custom_call.1} parent=1 // pred_fallthru
      _
    // Predicated region
    $region14: #{tpu_custom_call.1} parent=1 // pred_check
      _
    $region15: #{tpu_custom_call.1} parent=1 // pred_check_branch
      %35 = sbr.rel (0) target = $region17
    $region16: #{tpu_custom_call.1} parent=1 // pred_region
      %36 = dma.done [#allocation4], 64
    $region17: #{tpu_custom_call.1} parent=1 // pred_fallthru
      _
    %37 = vsyncpa [#allocation3], 1
    %38 = vsyncpa [#allocation4], 1

</llo_original>
